<compile_context>
chip_gen: v6e
topology: v6e:2x2x1
jax: 0.10.0
libtpu: 0.0.40
codegen_flags: <defaults>
</compile_context>

<pallas_src>
import functools

import jax
import jax.numpy as jnp
from jax.experimental import pallas as pl
from jax.experimental.pallas import tpu as pltpu


# -----------------------------------------------------------------------------
# pltpu.roll direction probe.
# The kernel needs shifted[:, p] == h[:, (p + off) mod n]. Probe the rotate
# direction convention once and choose the shift sign accordingly.
# -----------------------------------------------------------------------------
@functools.lru_cache(maxsize=1)
def _roll_is_jnp_like() -> bool:
    def probe_kernel(x_ref, o_ref):
        o_ref[...] = pltpu.roll(x_ref[...], shift=1, axis=1)

    x = jnp.tile(jnp.arange(128, dtype=jnp.float32)[None, :], (8, 1))
    r = pl.pallas_call(
        probe_kernel, out_shape=jax.ShapeDtypeStruct((8, 128), jnp.float32)
    )(x)
    # jnp.roll semantics: result[i] = x[(i - shift) mod n]  ->  r[0, 0] == 127.
    return float(r[0, 0]) == 127.0


# -----------------------------------------------------------------------------
# Kernel
# -----------------------------------------------------------------------------
def _make_bottleneck_kernel(B, W, HW, c_mid, skip_mode, tap_dtype, roll_jnp_like):
    BHW = B * HW

    def kernel(x_ref, w1_ref, b1_ref, w2_ref, b2_ref, w3_ref, b3_ref,
               mask_ref, o_ref):
        # Per grid step (= B images):
        #   x_ref    : (B, Cin, HW)     f32   NCHW-flat input (cast to bf16 in VMEM)
        #   w1_ref   : (M1, Cin)        bf16  conv1 (+ projection skip) with BN folded
        #   b1_ref   : (M1, 1)          f32
        #   w2_ref   : (Cmid, 9*Cmid)   bf16  conv2 taps concatenated along K
        #   b2_ref   : (Cmid, 1)        f32
        #   w3_ref   : (Cout, Cmid)     bf16
        #   b3_ref   : (Cout, 1)        f32
        #   mask_ref : (9, 1, B*HW)     tap_dtype  per-tap validity masks (tiled B times)
        #   o_ref    : (B, Cout, HW)    out dtype
        # Pack B images along the lane axis -> (Cin, B*HW) (static 128-aligned concat).
        x_parts = [x_ref[b] for b in range(B)]
        x_f32 = x_parts[0] if B == 1 else jnp.concatenate(x_parts, axis=1)
        x = x_f32.astype(jnp.bfloat16)

        # conv1+BN1 (and, if present, the projection-skip 1x1 conv+BN) in ONE matmul.
        y = jnp.dot(w1_ref[...], x, preferred_element_type=jnp.float32)
        y = y + b1_ref[...]
        h1 = jnp.maximum(y[:c_mid, :], 0.0)                         # (Cmid, B*HW) f32

        # 3x3 conv (padding=1) as ONE matmul: 9 lane-rolled + masked taps of h1,
        # concatenated along the contraction axis.
        h1t = h1.astype(tap_dtype)
        taps = []
        for k in range(9):
            dy, dx = divmod(k, 3)
            off = (dy - 1) * W + (dx - 1)
            if off == 0:                      # center tap: no shift, mask == 1
                taps.append(h1t)
                continue
            shift = (-off if roll_jnp_like else off) % BHW
            shifted = pltpu.roll(h1t, shift=shift, axis=1)
            taps.append(shifted * mask_ref[k])
        h1_taps = jnp.concatenate(taps, axis=0)                     # (9*Cmid, B*HW)
        if h1_taps.dtype != jnp.bfloat16:
            h1_taps = h1_taps.astype(jnp.bfloat16)

        h2 = jnp.dot(w2_ref[...], h1_taps, preferred_element_type=jnp.float32)
        h2 = jnp.maximum(h2 + b2_ref[...], 0.0)                     # (Cmid, B*HW)

        out = jnp.dot(w3_ref[...], h2.astype(jnp.bfloat16),
                      preferred_element_type=jnp.float32)
        out = out + b3_ref[...]
        if skip_mode == "proj":
            out = out + y[c_mid:, :]          # fused projection-skip rows
        elif skip_mode == "identity":
            out = out + x_f32                 # f32 residual, no identity matmul
        out = jnp.maximum(out, 0.0)

        # Unpack the lane axis back to (B, Cout, HW): static, 128-aligned lane slices.
        if B == 1:
            o_ref[0] = out.astype(o_ref.dtype)
        else:
            for b in range(B):
                o_ref[b] = out[:, b * HW:(b + 1) * HW].astype(o_ref.dtype)

    return kernel


# -----------------------------------------------------------------------------
# Wrapper helpers
# -----------------------------------------------------------------------------
def _fold_bn(w_oihw, gamma, beta, mean, var, eps):
    """Fold inference-mode BatchNorm2d into a bias-free conv's weight/bias."""
    scale = gamma / jnp.sqrt(var + eps)
    w = w_oihw * scale[:, None, None, None]
    b = beta - mean * scale
    return w, b


def _tap_compute_dtype():
    """bf16 tap math on v6e/v7x (native bf16 VALU/XLU, halves the biggest temp);
    f32 tap math elsewhere (v5e and older have no bf16 VPU)."""
    try:
        kind = jax.devices()[0].device_kind.lower()
    except Exception:  # pragma: no cover
        kind = ""
    return jnp.bfloat16 if ("v6" in kind or "v7" in kind) else jnp.float32


def _choose_pack(N, c_in, c_mid, c_out, HW, tap_bytes, out_bytes,
                 budget_bytes=24 * 1024 * 1024, max_pack=32):
    """Pick the per-grid-step image pack B: largest divisor of N that fits the VMEM
    budget, preferring >= 2 grid steps so both v7x TensorCores stay busy."""
    per_img = (2 * c_in * HW * 4                                      # x block (2-buf, f32)
               + 2 * c_out * HW * out_bytes                           # out block (2-buf)
               + c_in * HW * 6                                        # packed x (f32+bf16)
               + c_mid * HW * (4 + tap_bytes)                         # h1 (+tap copy)
               + 9 * c_mid * HW * (tap_bytes + (2 if tap_bytes == 4 else 0))  # taps
               + c_mid * HW * 6                                       # h2 (f32+bf16)
               + 2 * c_out * HW * 4)                                  # out temporaries
    b_max = int(max(1, min(max_pack, budget_bytes // per_img)))
    divs = [d for d in range(1, N + 1) if N % d == 0 and d <= b_max]
    pref = [d for d in divs if N // d >= 2]
    return max(pref) if pref else max(divs)


# -----------------------------------------------------------------------------
# Wrapper
# -----------------------------------------------------------------------------
def bottleneck_block(x_nchw, params, *, use_skip=False, stride=1, eps=1e-5,
                     out_dtype=jnp.float32):
    """Pallas TPU forward of BottleneckBlock. x: (N, Cin, H, W) f32 -> (N, Cout, H, W)."""
    if stride != 1:
        # TODO(synk): stride > 1 (strided 3x3 conv + strided skip) not implemented.
        raise NotImplementedError("only stride=1 is supported")

    N, c_in, H, W = x_nchw.shape
    c_mid = params["w1"].shape[0]
    c_out = params["w3"].shape[0]
    HW = H * W

    w1, b1 = _fold_bn(params["w1"], params["bn1_gamma"], params["bn1_beta"],
                      params["bn1_mean"], params["bn1_var"], eps)
    w2, b2 = _fold_bn(params["w2"], params["bn2_gamma"], params["bn2_beta"],
                      params["bn2_mean"], params["bn2_var"], eps)
    w3, b3 = _fold_bn(params["w3"], params["bn3_gamma"], params["bn3_beta"],
                      params["bn3_mean"], params["bn3_var"], eps)

    # Skip handling: fuse a projection skip into matmul-1; identity skip adds f32 x
    # directly inside the kernel; no skip -> no extra matmul rows at all.
    if use_skip and (stride != 1 or c_in != c_out):
        skip_mode = "proj"
        ws, bs = _fold_bn(params["w_skip"], params["bns_gamma"], params["bns_beta"],
                          params["bns_mean"], params["bns_var"], eps)
        w1cat = jnp.concatenate([w1[:, :, 0, 0], ws[:, :, 0, 0]], axis=0)
        b1cat = jnp.concatenate([b1, bs], axis=0)
    elif use_skip:
        skip_mode = "identity"
        w1cat, b1cat = w1[:, :, 0, 0], b1
    else:
        skip_mode = "none"
        w1cat, b1cat = w1[:, :, 0, 0], b1
    m1 = w1cat.shape[0]
    w1cat = w1cat.astype(jnp.bfloat16)
    b1cat = b1cat.reshape(m1, 1).astype(jnp.float32)

    # conv2 weights: (O, I, 3, 3) -> (O, 9*I), tap-major along K (tap k = dy*3+dx),
    # matching the kernel's tap concatenation order.
    w2cat = jnp.transpose(w2, (0, 2, 3, 1)).reshape(c_mid, 9 * c_mid).astype(jnp.bfloat16)
    b2k = b2.reshape(c_mid, 1).astype(jnp.float32)
    w3k = w3[:, :, 0, 0].astype(jnp.bfloat16)
    b3k = b3.reshape(c_out, 1).astype(jnp.float32)

    tap_dtype = _tap_compute_dtype()
    tap_bytes = jnp.dtype(tap_dtype).itemsize
    out_bytes = jnp.dtype(out_dtype).itemsize

    B = _choose_pack(N, c_in, c_mid, c_out, HW, tap_bytes, out_bytes)
    BHW = B * HW
    num_steps = N // B

    # Per-tap validity masks over one image's flattened spatial axis (zero wherever a
    # 3x3 tap would read the zero-padding ring or wrap across image rows), tiled B
    # times so they also kill cross-image wrap from the packed lane rolls.
    ii = jnp.arange(H)[:, None]
    jj = jnp.arange(W)[None, :]
    masks = []
    for dy in range(3):
        for dx in range(3):
            valid = ((ii + dy - 1 >= 0) & (ii + dy - 1 < H) &
                     (jj + dx - 1 >= 0) & (jj + dx - 1 < W))
            masks.append(valid.reshape(1, HW))
    mask = jnp.stack(masks, axis=0).astype(tap_dtype)       # (9, 1, HW)
    mask = jnp.tile(mask, (1, 1, B))                          # (9, 1, B*HW)

    # Kernel reads f32 NCHW directly (reshape is free); the bf16 cast happens in
    # VMEM right after the load -> no extra wrapper-side HBM pass.
    x_flat = x_nchw.reshape(N, c_in, HW)

    kernel = _make_bottleneck_kernel(B, W, HW, c_mid, skip_mode, tap_dtype,
                                     _roll_is_jnp_like())

    out_flat = pl.pallas_call(
        kernel,
        out_shape=jax.ShapeDtypeStruct((N, c_out, HW), out_dtype),
        grid=(num_steps,),
        in_specs=[
            pl.BlockSpec((B, c_in, HW), lambda n: (n, 0, 0)),          # x (B images)
            pl.BlockSpec((m1, c_in), lambda n: (0, 0)),                # w1 (+proj skip)
            pl.BlockSpec((m1, 1), lambda n: (0, 0)),                   # b1 (+proj skip)
            pl.BlockSpec((c_mid, 9 * c_mid), lambda n: (0, 0)),        # w2 (9 taps)
            pl.BlockSpec((c_mid, 1), lambda n: (0, 0)),                # b2
            pl.BlockSpec((c_out, c_mid), lambda n: (0, 0)),            # w3
            pl.BlockSpec((c_out, 1), lambda n: (0, 0)),                # b3
            pl.BlockSpec((9, 1, BHW), lambda n: (0, 0, 0)),            # tap masks
        ],
        out_specs=pl.BlockSpec((B, c_out, HW), lambda n: (n, 0, 0)),
        compiler_params=pltpu.CompilerParams(
            dimension_semantics=("parallel",),
            vmem_limit_bytes=48 * 1024 * 1024),
    )(x_flat, w1cat, b1cat, w2cat, b2k, w3k, b3k, mask)

    return out_flat.reshape(N, c_out, H, W)


# -----------------------------------------------------------------------------
# Deterministic synthetic parameters + plain-JAX reference for the self-test
# -----------------------------------------------------------------------------
def _make_params(key, c_in, c_mid, c_out):
    ks = jax.random.split(key, 8)

    def u(k, shape, fan_in):
        b = 1.0 / float(fan_in) ** 0.5
        return jax.random.uniform(k, shape, jnp.float32, -b, b)

    def bn_stats(k, c):
        kg, kb, km, kv = jax.random.split(k, 4)
        return dict(
            gamma=jax.random.uniform(kg, (c,), jnp.float32, 0.8, 1.2),
            beta=0.1 * jax.random.normal(kb, (c,), jnp.float32),
            mean=0.2 * jax.random.normal(km, (c,), jnp.float32),
            var=jax.random.uniform(kv, (c,), jnp.float32, 0.5, 1.5),
        )

    p = dict(
        w1=u(ks[0], (c_mid, c_in, 1, 1), c_in),
        w2=u(ks[1], (c_mid, c_mid, 3, 3), c_mid * 9),
        w3=u(ks[2], (c_out, c_mid, 1, 1), c_mid),
        w_skip=u(ks[3], (c_out, c_in, 1, 1), c_in),
    )
    for name, k, c in (("bn1", ks[4], c_mid), ("bn2", ks[5], c_mid),
                       ("bn3", ks[6], c_out), ("bns", ks[7], c_out)):
        for sname, v in bn_stats(k, c).items():
            p[f"{name}_{sname}"] = v
    return p


def _reference(x, params, *, use_skip=False, stride=1, eps=1e-5):
    """Plain-JAX (lax.conv) reference mirroring the PyTorch forward pass."""
    dn = ("NCHW", "OIHW", "NCHW")

    def conv(v, w, padding, strides=(1, 1)):
        return jax.lax.conv_general_dilated(v, w, strides, padding,
                                            dimension_numbers=dn)

    def bn(v, name):
        g = params[f"{name}_gamma"][None, :, None, None]
        b = params[f"{name}_beta"][None, :, None, None]
        m = params[f"{name}_mean"][None, :, None, None]
        var = params[f"{name}_var"][None, :, None, None]
        return (v - m) * g / jnp.sqrt(var + eps) + b

    c_in, c_out = params["w1"].shape[1], params["w3"].shape[0]
    h = jax.nn.relu(bn(conv(x, params["w1"], "VALID"), "bn1"))
    h = jax.nn.relu(bn(conv(h, params["w2"], ((1, 1), (1, 1)), (stride, stride)), "bn2"))
    h = bn(conv(h, params["w3"], "VALID"), "bn3")
    if use_skip:
        if stride != 1 or c_in != c_out:
            idn = bn(conv(x, params["w_skip"], "VALID", (stride, stride)), "bns")
        else:
            idn = x
        h = h + idn
    return jax.nn.relu(h)


def _check(out, ref, tag):
    max_err = float(jnp.max(jnp.abs(out - ref)))
    mean_err = float(jnp.mean(jnp.abs(out - ref)))
    # bf16 MXU operands vs f32 reference: tail errors stay well under 1e-1, while
    # structural bugs (e.g. wrong tap ordering) blow the mean error far above 1e-2.
    assert max_err < 1e-1 and mean_err < 1e-2, (
        f"mismatch vs reference ({tag}): max={max_err}, mean={mean_err}")


if __name__ == "__main__":
    key = jax.random.PRNGKey(0)
    kx1, kp1, kx2, kp2 = jax.random.split(key, 4)

    # Config A: projection skip / no skip (Cin != Cout), N=2 -> pack B=1, grid=(2,)
    N1, C_IN1, C_MID1, C_OUT1, H, W = 2, 4, 8, 8, 16, 16
    x1 = jax.random.normal(kx1, (N1, C_IN1, H, W), jnp.float32)
    p1 = _make_params(kp1, C_IN1, C_MID1, C_OUT1)
    for use_skip in (True, False):
        out = jax.block_until_ready(bottleneck_block(x1, p1, use_skip=use_skip))
        ref = _reference(x1, p1, use_skip=use_skip)
        assert out.shape == (N1, C_OUT1, H, W)
        _check(out, ref, f"proj/none use_skip={use_skip}")

    # Config B: identity skip (Cin == Cout), N=4 -> exercises image packing (B=2).
    N2, C2 = 4, 8
    x2 = jax.random.normal(kx2, (N2, C2, H, W), jnp.float32)
    p2 = _make_params(kp2, C2, C2, C2)
    out = jax.block_until_ready(bottleneck_block(x2, p2, use_skip=True))
    ref = _reference(x2, p2, use_skip=True)
    assert out.shape == (N2, C2, H, W)
    _check(out, ref, "identity skip, packed B>1")

    print("KERNEL_OK")
</pallas_src>

<mosaic_0001>
module attributes {stable_mosaic.version = 11 : i64} {
  func.func @probe_kernel(%arg0: memref<8x128xf32, #tpu.memory_space<vmem>>, %arg1: memref<8x128xf32, #tpu.memory_space<vmem>>) attributes {dimension_semantics = [], scalar_prefetch = 0 : i64, scratch_operands = 0 : i64, tpu.core_type = #tpu.core_type<tc>} {
    %c0 = arith.constant 0 : index
    %c0_0 = arith.constant 0 : index
    %0 = vector.load %arg0[%c0, %c0_0] : memref<8x128xf32, #tpu.memory_space<vmem>>, vector<8x128xf32>
    %c1_i32 = arith.constant 1 : i32
    %1 = tpu.dynamic_rotate %0 by %c1_i32 dim 1 : vector<8x128xf32>, i32 -> vector<8x128xf32>
    %c0_1 = arith.constant 0 : index
    %c0_2 = arith.constant 0 : index
    %2 = vector.load %arg1[%c0_1, %c0_2] : memref<8x128xf32, #tpu.memory_space<vmem>>, vector<8x128xf32>
    tpu.vector_store %arg1[%c0_1, %c0_2], %1 {strides = array<i32>} : memref<8x128xf32, #tpu.memory_space<vmem>>, vector<8x128xf32>,
    return
  }
}

</mosaic_0001>

<llo_original>
// kernel: tpu_custom_call.1
$region0: #{tpu_custom_call.1}
  #allocation0 [shape = 'u32[]', space=smem, size = 0x4, offset = 0x4, fixed_abs, tag = 'smem constant byte address 0x4 - core index']
  #allocation1 [shape = 'u32[144,128]{1,0:T(1,128)}', space=vmem, size = 0x12000, scoped, tag = 'internal scratch']
  %s0 = inlined_call_operand.hbm [shape: f32[8,128], index: 0, kind: input, shape index: {}]
  %s1 = inlined_call_operand.hbm [shape: f32[8,128], index: 1, kind: output, shape index: {}]
  %s2 = sld [smem:[#allocation0]]
  $region18: #{tpu_custom_call.1} parent=0
    _
  %s4 = ssub.s32 1, %s2
  %s5 = scalar_select 0, %s4, %s2
  $region1: #{tpu_custom_call.1} parent=0
    #allocation2 [shape = 'u8[4096]{0}', space=vmem, size = 0x1000, scoped, tag = 'input window, operand 0, single buffered']
    #allocation3 [shape = 's32[1]{0}', space=sflag, size = 0x4, scoped, tag = 'scoped memory for tpu_custom_call.1']
    #allocation4 [shape = 's32[1]{0}', space=sflag, size = 0x4, scoped, tag = 'scoped memory for tpu_custom_call.1']
    #allocation5 [shape = 'u8[4096]{0}', space=vmem, size = 0x1000, scoped, tag = 'output window, operand 0, single buffered']
    %6 = vsyncpa [#allocation3], 0
    %7 = vsyncpa [#allocation4], 0
    // Predicated region
    $region2: #{tpu_custom_call.1} parent=1 // pred_check
      _
    $region3: #{tpu_custom_call.1} parent=1 // pred_check_branch
      %9 = sbr.rel (0) target = $region5
    $region4: #{tpu_custom_call.1} parent=1 // pred_region
      %s11 = ssub.s32 128, 128
      %12 = vsyncadd [#allocation3], %s11
      %s14 = sshll.u32 [#allocation2], 4
      %s15 = int_to_ptr.vmem [resolvable:$true] %s14
      %17 = dma.hbm_to_vmem [thread:$0]  %s0, 128, %s15, [#allocation3]
    $region5: #{tpu_custom_call.1} parent=1 // pred_fallthru
      _
    // Predicated region
    $region6: #{tpu_custom_call.1} parent=1 // pred_check
      _
    $region7: #{tpu_custom_call.1} parent=1 // pred_check_branch
      %19 = sbr.rel (0) target = $region9
    $region8: #{tpu_custom_call.1} parent=1 // pred_region
      %20 = dma.done [#allocation3], 128
    $region9: #{tpu_custom_call.1} parent=1 // pred_fallthru
      _
    %v21 = vld [vmem:[#allocation2] sm:$0xff]
    %22 = vrot.lane.b32.xlu0 %v21, 1
    %v23 = vpop.permute.xlu0 %22
    %24 = vst [vmem:[#allocation5] sm:$0xff] %v23
    // Predicated region
    $region10: #{tpu_custom_call.1} parent=1 // pred_check
      _
    $region11: #{tpu_custom_call.1} parent=1 // pred_check_branch
      %26 = sbr.rel (0) target = $region13
    $region12: #{tpu_custom_call.1} parent=1 // pred_region
      %s28 = ssub.s32 128, 128
      %29 = vsyncadd [#allocation4], %s28
      %s31 = sshll.u32 [#allocation5], 4
      %s32 = int_to_ptr.vmem [resolvable:$true] %s31
      %34 = dma.vmem_to_hbm [thread:$0]  %s32, 128, %s1, [#allocation4]
    $region13: #{tpu_custom_call.1} parent=1 // pred_fallthru
      _
    // Predicated region
    $region14: #{tpu_custom_call.1} parent=1 // pred_check
      _
    $region15: #{tpu_custom_call.1} parent=1 // pred_check_branch
      %36 = sbr.rel (0) target = $region17
    $region16: #{tpu_custom_call.1} parent=1 // pred_region
      %37 = dma.done [#allocation4], 128
    $region17: #{tpu_custom_call.1} parent=1 // pred_fallthru
      _
    %38 = vsyncpa [#allocation3], 1
    %39 = vsyncpa [#allocation4], 1

</llo_original>
